<compile_context>
chip_gen: v5e
topology: v5e:2x2
jax: 0.10.0
libtpu: 0.0.40
codegen_flags: <defaults>
</compile_context>

<pallas_src>
import jax
import jax.numpy as jnp
from jax.experimental import pallas as pl
from jax.experimental.pallas import tpu as pltpu

# ----------------------------- model sizes -----------------------------
B = 2        # batch
T_X = 8      # source sequence length
T_Y = 6      # target sequence length
E = 16       # embedding dim
H = 32       # GRU hidden dim
V_SRC = 96   # source vocab size
V_TGT = 128  # len(ch_word_to_index)  (target vocab)

N_X = T_X * B                                  # 16 encoder rows, (t, b) ordered
N_Y = ((T_Y * B + 7) // 8) * 8                 # 16 decoder rows (padded to 8-multiple)
PACK_ROWS = ((E + H + 2 + 7) // 8) * 8         # 56 rows per packed GRU weight block


# ----------------------------- fused Pallas kernel -----------------------------
def seq2seq_kernel(xy_ref, mask_ref, gru_ref, outp_ref, out_ref):
    """Single-invocation kernel: encoder loop + batched decoder.

    xy_ref   : (N_X + N_Y, E)  embedded source rows then padded target rows, (t,b) order
    mask_ref : (N_X, H)        1.0 while t < x_lengths[b], else 0.0 (pre-broadcast)
    gru_ref  : (2, PACK_ROWS, 3H)  [0]=encoder [wi; wh; bi; bh; pad], [1]=decoder
    outp_ref : (H+1, V)        [dec_wo; dec_bo]
    out_ref  : (N_Y, V)        logits, rows ordered (t, b), rows >= T_Y*B are padding
    """
    # ---- encoder weights (one load, static aligned slices) ----
    enc = gru_ref[0]                                   # (PACK_ROWS, 3H)
    ewi = enc[:E]                                      # (E, 3H)
    ewh = enc[E:E + H]                                 # (H, 3H)
    ebi = enc[E + H:E + H + 1]                         # (1, 3H)
    # hoist the (1,3H)->(B,3H) broadcast out of the recurrent loop (no CSE in-loop)
    ebh_b = jnp.broadcast_to(enc[E + H + 1:E + H + 2], (B, 3 * H))

    xy = xy_ref[...]                                   # (N_X + N_Y, E)

    # ---- hoisted input-gate matmul: off the serial critical path ----
    gx_all = jnp.dot(xy[:N_X], ewi,
                     preferred_element_type=jnp.float32) + ebi        # (N_X, 3H)
    keep = mask_ref[...] != 0.0                                       # (N_X, H) bool

    # ---- encoder: statically unrolled, strictly serial in h ----
    h = jnp.zeros((B, H), jnp.float32)
    for t in range(T_X):
        gx = gx_all[t * B:(t + 1) * B]                                # (B, 3H) static slice
        gh = jnp.dot(h, ewh, preferred_element_type=jnp.float32) + ebh_b
        rz = jax.nn.sigmoid(gx[:, :2 * H] + gh[:, :2 * H])            # fused r/z: one EUP push
        r = rz[:, :H]
        z = rz[:, H:]
        n = jnp.tanh(gx[:, 2 * H:] + r * gh[:, 2 * H:])
        h_new = (1.0 - z) * n + z * h
        h = jnp.where(keep[t * B:(t + 1) * B], h_new, h)              # exact freeze (one vsel)

    # ---- decoder: no recurrence -> batch all T_y steps ----
    dec = gru_ref[1]
    dwi = dec[:E]
    dwh = dec[E:E + H]
    dbi = dec[E + H:E + H + 1]
    dbh = dec[E + H + 1:E + H + 2]

    y_all = xy[N_X:]                                                  # (N_Y, E)
    gx = jnp.dot(y_all, dwi, preferred_element_type=jnp.float32) + dbi    # (N_Y, 3H)
    # gh depends only on enc_hidden: compute ONCE.
    gh = jnp.dot(h, dwh, preferred_element_type=jnp.float32) + dbh        # (B, 3H)
    reps = N_Y // B
    gh_all = jnp.tile(gh, (reps, 1))                                  # (N_Y, 3H)
    h_all = jnp.tile(h, (reps, 1))                                    # (N_Y, H)

    rz = jax.nn.sigmoid(gx[:, :2 * H] + gh_all[:, :2 * H])            # fused r/z sigmoid
    r = rz[:, :H]
    z = rz[:, H:]
    n = jnp.tanh(gx[:, 2 * H:] + r * gh_all[:, 2 * H:])
    hd = (1.0 - z) * n + z * h_all                                    # (N_Y, H)

    outp = outp_ref[...]                                              # (H+1, V)
    logits = jnp.dot(hd, outp[:H],
                     preferred_element_type=jnp.float32) + outp[H:H + 1]   # (N_Y, V)
    out_ref[...] = logits                         # single lane-dense, unmasked store


# ----------------------------- host-side weight packing (done ONCE) -----------------------------
def pack_params(params):
    def pack(wi, wh, bi, bh):
        blk = jnp.concatenate([wi, wh, bi, bh], axis=0)               # (E+H+2, 3H)
        return jnp.pad(blk, ((0, PACK_ROWS - blk.shape[0]), (0, 0)))
    gru = jnp.stack([
        pack(params["enc_wi"], params["enc_wh"], params["enc_bi"], params["enc_bh"]),
        pack(params["dec_wi"], params["dec_wh"], params["dec_bi"], params["dec_bh"]),
    ]).astype(jnp.float32)                                            # (2, PACK_ROWS, 3H)
    outp = jnp.concatenate([params["dec_wo"], params["dec_bo"]],
                           axis=0).astype(jnp.float32)                # (H+1, V)
    return {
        "enc_embed": params["enc_embed"].astype(jnp.float32),
        "dec_embed": params["dec_embed"].astype(jnp.float32),
        "gru_pack": gru,
        "out_pack": outp,
    }


# ----------------------------- wrapper -----------------------------
def seq2seq_forward(x, x_lengths, y, y_lengths, packed):
    """Mirrors Seq2Seq.forward: returns (T_y, B, V) logits.

    x: (B, T_x) int32 tokens, y: (B, T_y) int32 tokens.
    y_lengths is accepted for signature parity but unused (as in the module).
    """
    del y_lengths
    b, t_x = x.shape
    t_y = y.shape[1]
    v = packed["out_pack"].shape[1]

    # Time-major embedding lookup: transpose only the tiny int token matrices.
    x_emb = jnp.take(packed["enc_embed"], x.T, axis=0)                # (T_x, B, E)
    y_emb = jnp.take(packed["dec_embed"], y.T, axis=0)                # (T_y, B, E)
    e = x_emb.shape[-1]

    x_flat = x_emb.reshape(t_x * b, e)
    y_flat = y_emb.reshape(t_y * b, e)
    n_y = ((t_y * b + 7) // 8) * 8
    y_flat = jnp.pad(y_flat, ((0, n_y - t_y * b), (0, 0)))
    xy = jnp.concatenate([x_flat, y_flat], axis=0)                    # (N_X + N_Y, E)

    # pack_padded_sequence emulation: validity mask, pre-broadcast to H lanes.
    mask = (jnp.arange(t_x)[:, None] < x_lengths[None, :]).astype(jnp.float32)  # (T_x, B)
    mask = jnp.broadcast_to(mask[:, :, None], (t_x, b, H)).reshape(t_x * b, H)

    vmem = pl.BlockSpec(memory_space=pltpu.MemorySpace.VMEM)
    out_flat = pl.pallas_call(
        seq2seq_kernel,
        out_shape=jax.ShapeDtypeStruct((n_y, v), jnp.float32),
        in_specs=[vmem] * 4,
        out_specs=vmem,
    )(xy, mask, packed["gru_pack"], packed["out_pack"])

    return out_flat[:t_y * b].reshape(t_y, b, v)                      # (T_y, B, V)


# ----------------------------- pure-JAX reference -----------------------------
def _ref_forward(x, x_lengths, y, params):
    x_emb = jnp.take(params["enc_embed"], x, axis=0)                  # (B, T_x, E)
    y_emb = jnp.take(params["dec_embed"], y, axis=0)                  # (B, T_y, E)

    def cell(x_t, h, wi, wh, bi, bh):
        gx = x_t @ wi + bi
        gh = h @ wh + bh
        r = jax.nn.sigmoid(gx[:, :H] + gh[:, :H])
        z = jax.nn.sigmoid(gx[:, H:2 * H] + gh[:, H:2 * H])
        n = jnp.tanh(gx[:, 2 * H:] + r * gh[:, 2 * H:])
        return (1.0 - z) * n + z * h

    h = jnp.zeros((x.shape[0], H), jnp.float32)
    for t in range(x.shape[1]):
        h_new = cell(x_emb[:, t], h, params["enc_wi"], params["enc_wh"],
                     params["enc_bi"], params["enc_bh"])
        mask = (t < x_lengths)[:, None]
        h = jnp.where(mask, h_new, h)
    outs = []
    for i in range(y.shape[1]):
        hd = cell(y_emb[:, i], h, params["dec_wi"], params["dec_wh"],
                  params["dec_bi"], params["dec_bh"])
        outs.append(hd @ params["dec_wo"] + params["dec_bo"])
    return jnp.stack(outs, axis=0)


# ----------------------------- parameter init -----------------------------
def init_params(key):
    ks = jax.random.split(key, 10)
    s = 0.1
    return {
        "enc_embed": s * jax.random.normal(ks[0], (V_SRC, E), jnp.float32),
        "enc_wi": s * jax.random.normal(ks[1], (E, 3 * H), jnp.float32),
        "enc_wh": s * jax.random.normal(ks[2], (H, 3 * H), jnp.float32),
        "enc_bi": s * jax.random.normal(ks[3], (1, 3 * H), jnp.float32),
        "enc_bh": s * jax.random.normal(ks[4], (1, 3 * H), jnp.float32),
        "dec_embed": s * jax.random.normal(ks[5], (V_TGT, E), jnp.float32),
        "dec_wi": s * jax.random.normal(ks[6], (E, 3 * H), jnp.float32),
        "dec_wh": s * jax.random.normal(ks[7], (H, 3 * H), jnp.float32),
        "dec_bi": s * jax.random.normal(ks[8], (1, 3 * H), jnp.float32),
        "dec_bh": s * jax.random.normal(ks[9], (1, 3 * H), jnp.float32),
        "dec_wo": s * jax.random.normal(jax.random.fold_in(key, 100),
                                        (H, V_TGT), jnp.float32),
        "dec_bo": s * jax.random.normal(jax.random.fold_in(key, 101),
                                        (1, V_TGT), jnp.float32),
    }


if __name__ == "__main__":
    key = jax.random.PRNGKey(0)
    params = init_params(key)
    packed = pack_params(params)          # one-time host-side weight packing

    kx, ky = jax.random.split(jax.random.fold_in(key, 7))
    x = jax.random.randint(kx, (B, T_X), 0, V_SRC, dtype=jnp.int32)
    y = jax.random.randint(ky, (B, T_Y), 0, V_TGT, dtype=jnp.int32)
    x_lengths = jnp.array([T_X, T_X - 3], dtype=jnp.int32)   # ragged source
    y_lengths = jnp.array([T_Y, T_Y - 2], dtype=jnp.int32)   # unused (as in torch)

    out = seq2seq_forward(x, x_lengths, y, y_lengths, packed)
    out = jax.block_until_ready(out)
    assert out.shape == (T_Y, B, V_TGT), out.shape

    ref = _ref_forward(x, x_lengths, y, params)
    assert jnp.allclose(out, ref, atol=1e-5, rtol=1e-5), \
        float(jnp.max(jnp.abs(out - ref)))

    # TODO(synk): `translate` (greedy argmax loop with <EOS> early-exit) is
    # data-dependent host-side control flow and is not ported to a kernel.
    print("KERNEL_OK")
</pallas_src>

<mosaic_0001>
module attributes {stable_mosaic.version = 11 : i64} {
  func.func @seq2seq_kernel(%arg0: memref<32x16xf32, #tpu.memory_space<vmem>>, %arg1: memref<16x32xf32, #tpu.memory_space<vmem>>, %arg2: memref<2x56x96xf32, #tpu.memory_space<vmem>>, %arg3: memref<33x128xf32, #tpu.memory_space<vmem>>, %arg4: memref<16x128xf32, #tpu.memory_space<vmem>>) attributes {dimension_semantics = [], scalar_prefetch = 0 : i64, scratch_operands = 0 : i64, tpu.core_type = #tpu.core_type<tc>} {
    %c0 = arith.constant 0 : index
    %c0_0 = arith.constant 0 : index
    %c0_1 = arith.constant 0 : index
    %0 = vector.load %arg2[%c0, %c0_0, %c0_1] : memref<2x56x96xf32, #tpu.memory_space<vmem>>, vector<1x56x96xf32>
    %1 = vector.shape_cast %0 : vector<1x56x96xf32> to vector<56x96xf32>
    %2 = vector.extract_strided_slice %1 {offsets = [0, 0], sizes = [16, 96], strides = [1, 1]} : vector<56x96xf32> to vector<16x96xf32>
    %3 = vector.extract_strided_slice %1 {offsets = [16, 0], sizes = [32, 96], strides = [1, 1]} : vector<56x96xf32> to vector<32x96xf32>
    %4 = vector.extract_strided_slice %1 {offsets = [48, 0], sizes = [1, 96], strides = [1, 1]} : vector<56x96xf32> to vector<1x96xf32>
    %5 = vector.extract_strided_slice %1 {offsets = [49, 0], sizes = [1, 96], strides = [1, 1]} : vector<56x96xf32> to vector<1x96xf32>
    %6 = vector.shape_cast %5 : vector<1x96xf32> to vector<1x96xf32>
    %7 = vector.broadcast %6 : vector<1x96xf32> to vector<2x96xf32>
    %c0_2 = arith.constant 0 : index
    %c0_3 = arith.constant 0 : index
    %8 = vector.load %arg0[%c0_2, %c0_3] : memref<32x16xf32, #tpu.memory_space<vmem>>, vector<32x16xf32>
    %9 = vector.extract_strided_slice %8 {offsets = [0, 0], sizes = [16, 16], strides = [1, 1]} : vector<32x16xf32> to vector<16x16xf32>
    %cst = arith.constant dense<0.000000e+00> : vector<16x96xf32>
    %10 = tpu.matmul %9, %2, %cst {dimension_numbers = #tpu.dot_dimension_numbers<[1], [0], [0], [1], [0, 0, 1, 1], [], []>} : vector<16x16xf32>, vector<16x96xf32>, vector<16x96xf32> -> vector<16x96xf32>
    %11 = vector.broadcast %4 : vector<1x96xf32> to vector<16x96xf32>
    %12 = arith.addf %10, %11 : vector<16x96xf32>
    %c0_4 = arith.constant 0 : index
    %c0_5 = arith.constant 0 : index
    %13 = vector.load %arg1[%c0_4, %c0_5] : memref<16x32xf32, #tpu.memory_space<vmem>>, vector<16x32xf32>
    %cst_6 = arith.constant 0.000000e+00 : f32
    %14 = vector.broadcast %cst_6 : f32 to vector<16x32xf32>
    %15 = arith.cmpf one, %13, %14 : vector<16x32xf32>
    %cst_7 = arith.constant 0.000000e+00 : f32
    %16 = vector.broadcast %cst_7 : f32 to vector<2x32xf32>
    %17 = vector.extract_strided_slice %12 {offsets = [0, 0], sizes = [2, 96], strides = [1, 1]} : vector<16x96xf32> to vector<2x96xf32>
    %cst_8 = arith.constant dense<0.000000e+00> : vector<2x96xf32>
    %18 = tpu.matmul %16, %3, %cst_8 {dimension_numbers = #tpu.dot_dimension_numbers<[1], [0], [0], [1], [0, 0, 1, 1], [], []>} : vector<2x32xf32>, vector<32x96xf32>, vector<2x96xf32> -> vector<2x96xf32>
    %19 = arith.addf %18, %7 : vector<2x96xf32>
    %20 = vector.extract_strided_slice %17 {offsets = [0, 0], sizes = [2, 64], strides = [1, 1]} : vector<2x96xf32> to vector<2x64xf32>
    %21 = vector.extract_strided_slice %19 {offsets = [0, 0], sizes = [2, 64], strides = [1, 1]} : vector<2x96xf32> to vector<2x64xf32>
    %22 = arith.addf %20, %21 : vector<2x64xf32>
    %23 = arith.negf %22 : vector<2x64xf32>
    %24 = math.exp %23 : vector<2x64xf32>
    %cst_9 = arith.constant 1.000000e+00 : f32
    %25 = vector.broadcast %cst_9 : f32 to vector<2x64xf32>
    %26 = arith.addf %25, %24 : vector<2x64xf32>
    %27 = arith.divf %25, %26 : vector<2x64xf32>
    %28 = vector.extract_strided_slice %27 {offsets = [0, 0], sizes = [2, 32], strides = [1, 1]} : vector<2x64xf32> to vector<2x32xf32>
    %29 = vector.extract_strided_slice %27 {offsets = [0, 32], sizes = [2, 32], strides = [1, 1]} : vector<2x64xf32> to vector<2x32xf32>
    %30 = vector.extract_strided_slice %17 {offsets = [0, 64], sizes = [2, 32], strides = [1, 1]} : vector<2x96xf32> to vector<2x32xf32>
    %31 = vector.extract_strided_slice %19 {offsets = [0, 64], sizes = [2, 32], strides = [1, 1]} : vector<2x96xf32> to vector<2x32xf32>
    %32 = arith.mulf %28, %31 : vector<2x32xf32>
    %33 = arith.addf %30, %32 : vector<2x32xf32>
    %34 = math.tanh %33 : vector<2x32xf32>
    %cst_10 = arith.constant 1.000000e+00 : f32
    %35 = vector.broadcast %cst_10 : f32 to vector<2x32xf32>
    %36 = arith.subf %35, %29 : vector<2x32xf32>
    %37 = arith.mulf %36, %34 : vector<2x32xf32>
    %38 = arith.mulf %29, %16 : vector<2x32xf32>
    %39 = arith.addf %37, %38 : vector<2x32xf32>
    %40 = vector.extract_strided_slice %15 {offsets = [0, 0], sizes = [2, 32], strides = [1, 1]} : vector<16x32xi1> to vector<2x32xi1>
    %41 = arith.select %40, %39, %16 : vector<2x32xi1>, vector<2x32xf32>
    %42 = vector.extract_strided_slice %12 {offsets = [2, 0], sizes = [2, 96], strides = [1, 1]} : vector<16x96xf32> to vector<2x96xf32>
    %cst_11 = arith.constant dense<0.000000e+00> : vector<2x96xf32>
    %43 = tpu.matmul %41, %3, %cst_11 {dimension_numbers = #tpu.dot_dimension_numbers<[1], [0], [0], [1], [0, 0, 1, 1], [], []>} : vector<2x32xf32>, vector<32x96xf32>, vector<2x96xf32> -> vector<2x96xf32>
    %44 = arith.addf %43, %7 : vector<2x96xf32>
    %45 = vector.extract_strided_slice %42 {offsets = [0, 0], sizes = [2, 64], strides = [1, 1]} : vector<2x96xf32> to vector<2x64xf32>
    %46 = vector.extract_strided_slice %44 {offsets = [0, 0], sizes = [2, 64], strides = [1, 1]} : vector<2x96xf32> to vector<2x64xf32>
    %47 = arith.addf %45, %46 : vector<2x64xf32>
    %48 = arith.negf %47 : vector<2x64xf32>
    %49 = math.exp %48 : vector<2x64xf32>
    %cst_12 = arith.constant 1.000000e+00 : f32
    %50 = vector.broadcast %cst_12 : f32 to vector<2x64xf32>
    %51 = arith.addf %50, %49 : vector<2x64xf32>
    %52 = arith.divf %50, %51 : vector<2x64xf32>
    %53 = vector.extract_strided_slice %52 {offsets = [0, 0], sizes = [2, 32], strides = [1, 1]} : vector<2x64xf32> to vector<2x32xf32>
    %54 = vector.extract_strided_slice %52 {offsets = [0, 32], sizes = [2, 32], strides = [1, 1]} : vector<2x64xf32> to vector<2x32xf32>
    %55 = vector.extract_strided_slice %42 {offsets = [0, 64], sizes = [2, 32], strides = [1, 1]} : vector<2x96xf32> to vector<2x32xf32>
    %56 = vector.extract_strided_slice %44 {offsets = [0, 64], sizes = [2, 32], strides = [1, 1]} : vector<2x96xf32> to vector<2x32xf32>
    %57 = arith.mulf %53, %56 : vector<2x32xf32>
    %58 = arith.addf %55, %57 : vector<2x32xf32>
    %59 = math.tanh %58 : vector<2x32xf32>
    %cst_13 = arith.constant 1.000000e+00 : f32
    %60 = vector.broadcast %cst_13 : f32 to vector<2x32xf32>
    %61 = arith.subf %60, %54 : vector<2x32xf32>
    %62 = arith.mulf %61, %59 : vector<2x32xf32>
    %63 = arith.mulf %54, %41 : vector<2x32xf32>
    %64 = arith.addf %62, %63 : vector<2x32xf32>
    %65 = vector.extract_strided_slice %15 {offsets = [2, 0], sizes = [2, 32], strides = [1, 1]} : vector<16x32xi1> to vector<2x32xi1>
    %66 = arith.select %65, %64, %41 : vector<2x32xi1>, vector<2x32xf32>
    %67 = vector.extract_strided_slice %12 {offsets = [4, 0], sizes = [2, 96], strides = [1, 1]} : vector<16x96xf32> to vector<2x96xf32>
    %cst_14 = arith.constant dense<0.000000e+00> : vector<2x96xf32>
    %68 = tpu.matmul %66, %3, %cst_14 {dimension_numbers = #tpu.dot_dimension_numbers<[1], [0], [0], [1], [0, 0, 1, 1], [], []>} : vector<2x32xf32>, vector<32x96xf32>, vector<2x96xf32> -> vector<2x96xf32>
    %69 = arith.addf %68, %7 : vector<2x96xf32>
    %70 = vector.extract_strided_slice %67 {offsets = [0, 0], sizes = [2, 64], strides = [1, 1]} : vector<2x96xf32> to vector<2x64xf32>
    %71 = vector.extract_strided_slice %69 {offsets = [0, 0], sizes = [2, 64], strides = [1, 1]} : vector<2x96xf32> to vector<2x64xf32>
    %72 = arith.addf %70, %71 : vector<2x64xf32>
    %73 = arith.negf %72 : vector<2x64xf32>
    %74 = math.exp %73 : vector<2x64xf32>
    %cst_15 = arith.constant 1.000000e+00 : f32
    %75 = vector.broadcast %cst_15 : f32 to vector<2x64xf32>
    %76 = arith.addf %75, %74 : vector<2x64xf32>
    %77 = arith.divf %75, %76 : vector<2x64xf32>
    %78 = vector.extract_strided_slice %77 {offsets = [0, 0], sizes = [2, 32], strides = [1, 1]} : vector<2x64xf32> to vector<2x32xf32>
    %79 = vector.extract_strided_slice %77 {offsets = [0, 32], sizes = [2, 32], strides = [1, 1]} : vector<2x64xf32> to vector<2x32xf32>
    %80 = vector.extract_strided_slice %67 {offsets = [0, 64], sizes = [2, 32], strides = [1, 1]} : vector<2x96xf32> to vector<2x32xf32>
    %81 = vector.extract_strided_slice %69 {offsets = [0, 64], sizes = [2, 32], strides = [1, 1]} : vector<2x96xf32> to vector<2x32xf32>
    %82 = arith.mulf %78, %81 : vector<2x32xf32>
    %83 = arith.addf %80, %82 : vector<2x32xf32>
    %84 = math.tanh %83 : vector<2x32xf32>
    %cst_16 = arith.constant 1.000000e+00 : f32
    %85 = vector.broadcast %cst_16 : f32 to vector<2x32xf32>
    %86 = arith.subf %85, %79 : vector<2x32xf32>
    %87 = arith.mulf %86, %84 : vector<2x32xf32>
    %88 = arith.mulf %79, %66 : vector<2x32xf32>
    %89 = arith.addf %87, %88 : vector<2x32xf32>
    %90 = vector.extract_strided_slice %15 {offsets = [4, 0], sizes = [2, 32], strides = [1, 1]} : vector<16x32xi1> to vector<2x32xi1>
    %91 = arith.select %90, %89, %66 : vector<2x32xi1>, vector<2x32xf32>
    %92 = vector.extract_strided_slice %12 {offsets = [6, 0], sizes = [2, 96], strides = [1, 1]} : vector<16x96xf32> to vector<2x96xf32>
    %cst_17 = arith.constant dense<0.000000e+00> : vector<2x96xf32>
    %93 = tpu.matmul %91, %3, %cst_17 {dimension_numbers = #tpu.dot_dimension_numbers<[1], [0], [0], [1], [0, 0, 1, 1], [], []>} : vector<2x32xf32>, vector<32x96xf32>, vector<2x96xf32> -> vector<2x96xf32>
    %94 = arith.addf %93, %7 : vector<2x96xf32>
    %95 = vector.extract_strided_slice %92 {offsets = [0, 0], sizes = [2, 64], strides = [1, 1]} : vector<2x96xf32> to vector<2x64xf32>
    %96 = vector.extract_strided_slice %94 {offsets = [0, 0], sizes = [2, 64], strides = [1, 1]} : vector<2x96xf32> to vector<2x64xf32>
    %97 = arith.addf %95, %96 : vector<2x64xf32>
    %98 = arith.negf %97 : vector<2x64xf32>
    %99 = math.exp %98 : vector<2x64xf32>
    %cst_18 = arith.constant 1.000000e+00 : f32
    %100 = vector.broadcast %cst_18 : f32 to vector<2x64xf32>
    %101 = arith.addf %100, %99 : vector<2x64xf32>
    %102 = arith.divf %100, %101 : vector<2x64xf32>
    %103 = vector.extract_strided_slice %102 {offsets = [0, 0], sizes = [2, 32], strides = [1, 1]} : vector<2x64xf32> to vector<2x32xf32>
    %104 = vector.extract_strided_slice %102 {offsets = [0, 32], sizes = [2, 32], strides = [1, 1]} : vector<2x64xf32> to vector<2x32xf32>
    %105 = vector.extract_strided_slice %92 {offsets = [0, 64], sizes = [2, 32], strides = [1, 1]} : vector<2x96xf32> to vector<2x32xf32>
    %106 = vector.extract_strided_slice %94 {offsets = [0, 64], sizes = [2, 32], strides = [1, 1]} : vector<2x96xf32> to vector<2x32xf32>
    %107 = arith.mulf %103, %106 : vector<2x32xf32>
    %108 = arith.addf %105, %107 : vector<2x32xf32>
    %109 = math.tanh %108 : vector<2x32xf32>
    %cst_19 = arith.constant 1.000000e+00 : f32
    %110 = vector.broadcast %cst_19 : f32 to vector<2x32xf32>
    %111 = arith.subf %110, %104 : vector<2x32xf32>
    %112 = arith.mulf %111, %109 : vector<2x32xf32>
    %113 = arith.mulf %104, %91 : vector<2x32xf32>
    %114 = arith.addf %112, %113 : vector<2x32xf32>
    %115 = vector.extract_strided_slice %15 {offsets = [6, 0], sizes = [2, 32], strides = [1, 1]} : vector<16x32xi1> to vector<2x32xi1>
    %116 = arith.select %115, %114, %91 : vector<2x32xi1>, vector<2x32xf32>
    %117 = vector.extract_strided_slice %12 {offsets = [8, 0], sizes = [2, 96], strides = [1, 1]} : vector<16x96xf32> to vector<2x96xf32>
    %cst_20 = arith.constant dense<0.000000e+00> : vector<2x96xf32>
    %118 = tpu.matmul %116, %3, %cst_20 {dimension_numbers = #tpu.dot_dimension_numbers<[1], [0], [0], [1], [0, 0, 1, 1], [], []>} : vector<2x32xf32>, vector<32x96xf32>, vector<2x96xf32> -> vector<2x96xf32>
    %119 = arith.addf %118, %7 : vector<2x96xf32>
    %120 = vector.extract_strided_slice %117 {offsets = [0, 0], sizes = [2, 64], strides = [1, 1]} : vector<2x96xf32> to vector<2x64xf32>
    %121 = vector.extract_strided_slice %119 {offsets = [0, 0], sizes = [2, 64], strides = [1, 1]} : vector<2x96xf32> to vector<2x64xf32>
    %122 = arith.addf %120, %121 : vector<2x64xf32>
    %123 = arith.negf %122 : vector<2x64xf32>
    %124 = math.exp %123 : vector<2x64xf32>
    %cst_21 = arith.constant 1.000000e+00 : f32
    %125 = vector.broadcast %cst_21 : f32 to vector<2x64xf32>
    %126 = arith.addf %125, %124 : vector<2x64xf32>
    %127 = arith.divf %125, %126 : vector<2x64xf32>
    %128 = vector.extract_strided_slice %127 {offsets = [0, 0], sizes = [2, 32], strides = [1, 1]} : vector<2x64xf32> to vector<2x32xf32>
    %129 = vector.extract_strided_slice %127 {offsets = [0, 32], sizes = [2, 32], strides = [1, 1]} : vector<2x64xf32> to vector<2x32xf32>
    %130 = vector.extract_strided_slice %117 {offsets = [0, 64], sizes = [2, 32], strides = [1, 1]} : vector<2x96xf32> to vector<2x32xf32>
    %131 = vector.extract_strided_slice %119 {offsets = [0, 64], sizes = [2, 32], strides = [1, 1]} : vector<2x96xf32> to vector<2x32xf32>
    %132 = arith.mulf %128, %131 : vector<2x32xf32>
    %133 = arith.addf %130, %132 : vector<2x32xf32>
    %134 = math.tanh %133 : vector<2x32xf32>
    %cst_22 = arith.constant 1.000000e+00 : f32
    %135 = vector.broadcast %cst_22 : f32 to vector<2x32xf32>
    %136 = arith.subf %135, %129 : vector<2x32xf32>
    %137 = arith.mulf %136, %134 : vector<2x32xf32>
    %138 = arith.mulf %129, %116 : vector<2x32xf32>
    %139 = arith.addf %137, %138 : vector<2x32xf32>
    %140 = vector.extract_strided_slice %15 {offsets = [8, 0], sizes = [2, 32], strides = [1, 1]} : vector<16x32xi1> to vector<2x32xi1>
    %141 = arith.select %140, %139, %116 : vector<2x32xi1>, vector<2x32xf32>
    %142 = vector.extract_strided_slice %12 {offsets = [10, 0], sizes = [2, 96], strides = [1, 1]} : vector<16x96xf32> to vector<2x96xf32>
    %cst_23 = arith.constant dense<0.000000e+00> : vector<2x96xf32>
    %143 = tpu.matmul %141, %3, %cst_23 {dimension_numbers = #tpu.dot_dimension_numbers<[1], [0], [0], [1], [0, 0, 1, 1], [], []>} : vector<2x32xf32>, vector<32x96xf32>, vector<2x96xf32> -> vector<2x96xf32>
    %144 = arith.addf %143, %7 : vector<2x96xf32>
    %145 = vector.extract_strided_slice %142 {offsets = [0, 0], sizes = [2, 64], strides = [1, 1]} : vector<2x96xf32> to vector<2x64xf32>
    %146 = vector.extract_strided_slice %144 {offsets = [0, 0], sizes = [2, 64], strides = [1, 1]} : vector<2x96xf32> to vector<2x64xf32>
    %147 = arith.addf %145, %146 : vector<2x64xf32>
    %148 = arith.negf %147 : vector<2x64xf32>
    %149 = math.exp %148 : vector<2x64xf32>
    %cst_24 = arith.constant 1.000000e+00 : f32
    %150 = vector.broadcast %cst_24 : f32 to vector<2x64xf32>
    %151 = arith.addf %150, %149 : vector<2x64xf32>
    %152 = arith.divf %150, %151 : vector<2x64xf32>
    %153 = vector.extract_strided_slice %152 {offsets = [0, 0], sizes = [2, 32], strides = [1, 1]} : vector<2x64xf32> to vector<2x32xf32>
    %154 = vector.extract_strided_slice %152 {offsets = [0, 32], sizes = [2, 32], strides = [1, 1]} : vector<2x64xf32> to vector<2x32xf32>
    %155 = vector.extract_strided_slice %142 {offsets = [0, 64], sizes = [2, 32], strides = [1, 1]} : vector<2x96xf32> to vector<2x32xf32>
    %156 = vector.extract_strided_slice %144 {offsets = [0, 64], sizes = [2, 32], strides = [1, 1]} : vector<2x96xf32> to vector<2x32xf32>
    %157 = arith.mulf %153, %156 : vector<2x32xf32>
    %158 = arith.addf %155, %157 : vector<2x32xf32>
    %159 = math.tanh %158 : vector<2x32xf32>
    %cst_25 = arith.constant 1.000000e+00 : f32
    %160 = vector.broadcast %cst_25 : f32 to vector<2x32xf32>
    %161 = arith.subf %160, %154 : vector<2x32xf32>
    %162 = arith.mulf %161, %159 : vector<2x32xf32>
    %163 = arith.mulf %154, %141 : vector<2x32xf32>
    %164 = arith.addf %162, %163 : vector<2x32xf32>
    %165 = vector.extract_strided_slice %15 {offsets = [10, 0], sizes = [2, 32], strides = [1, 1]} : vector<16x32xi1> to vector<2x32xi1>
    %166 = arith.select %165, %164, %141 : vector<2x32xi1>, vector<2x32xf32>
    %167 = vector.extract_strided_slice %12 {offsets = [12, 0], sizes = [2, 96], strides = [1, 1]} : vector<16x96xf32> to vector<2x96xf32>
    %cst_26 = arith.constant dense<0.000000e+00> : vector<2x96xf32>
    %168 = tpu.matmul %166, %3, %cst_26 {dimension_numbers = #tpu.dot_dimension_numbers<[1], [0], [0], [1], [0, 0, 1, 1], [], []>} : vector<2x32xf32>, vector<32x96xf32>, vector<2x96xf32> -> vector<2x96xf32>
    %169 = arith.addf %168, %7 : vector<2x96xf32>
    %170 = vector.extract_strided_slice %167 {offsets = [0, 0], sizes = [2, 64], strides = [1, 1]} : vector<2x96xf32> to vector<2x64xf32>
    %171 = vector.extract_strided_slice %169 {offsets = [0, 0], sizes = [2, 64], strides = [1, 1]} : vector<2x96xf32> to vector<2x64xf32>
    %172 = arith.addf %170, %171 : vector<2x64xf32>
    %173 = arith.negf %172 : vector<2x64xf32>
    %174 = math.exp %173 : vector<2x64xf32>
    %cst_27 = arith.constant 1.000000e+00 : f32
    %175 = vector.broadcast %cst_27 : f32 to vector<2x64xf32>
    %176 = arith.addf %175, %174 : vector<2x64xf32>
    %177 = arith.divf %175, %176 : vector<2x64xf32>
    %178 = vector.extract_strided_slice %177 {offsets = [0, 0], sizes = [2, 32], strides = [1, 1]} : vector<2x64xf32> to vector<2x32xf32>
    %179 = vector.extract_strided_slice %177 {offsets = [0, 32], sizes = [2, 32], strides = [1, 1]} : vector<2x64xf32> to vector<2x32xf32>
    %180 = vector.extract_strided_slice %167 {offsets = [0, 64], sizes = [2, 32], strides = [1, 1]} : vector<2x96xf32> to vector<2x32xf32>
    %181 = vector.extract_strided_slice %169 {offsets = [0, 64], sizes = [2, 32], strides = [1, 1]} : vector<2x96xf32> to vector<2x32xf32>
    %182 = arith.mulf %178, %181 : vector<2x32xf32>
    %183 = arith.addf %180, %182 : vector<2x32xf32>
    %184 = math.tanh %183 : vector<2x32xf32>
    %cst_28 = arith.constant 1.000000e+00 : f32
    %185 = vector.broadcast %cst_28 : f32 to vector<2x32xf32>
    %186 = arith.subf %185, %179 : vector<2x32xf32>
    %187 = arith.mulf %186, %184 : vector<2x32xf32>
    %188 = arith.mulf %179, %166 : vector<2x32xf32>
    %189 = arith.addf %187, %188 : vector<2x32xf32>
    %190 = vector.extract_strided_slice %15 {offsets = [12, 0], sizes = [2, 32], strides = [1, 1]} : vector<16x32xi1> to vector<2x32xi1>
    %191 = arith.select %190, %189, %166 : vector<2x32xi1>, vector<2x32xf32>
    %192 = vector.extract_strided_slice %12 {offsets = [14, 0], sizes = [2, 96], strides = [1, 1]} : vector<16x96xf32> to vector<2x96xf32>
    %cst_29 = arith.constant dense<0.000000e+00> : vector<2x96xf32>
    %193 = tpu.matmul %191, %3, %cst_29 {dimension_numbers = #tpu.dot_dimension_numbers<[1], [0], [0], [1], [0, 0, 1, 1], [], []>} : vector<2x32xf32>, vector<32x96xf32>, vector<2x96xf32> -> vector<2x96xf32>
    %194 = arith.addf %193, %7 : vector<2x96xf32>
    %195 = vector.extract_strided_slice %192 {offsets = [0, 0], sizes = [2, 64], strides = [1, 1]} : vector<2x96xf32> to vector<2x64xf32>
    %196 = vector.extract_strided_slice %194 {offsets = [0, 0], sizes = [2, 64], strides = [1, 1]} : vector<2x96xf32> to vector<2x64xf32>
    %197 = arith.addf %195, %196 : vector<2x64xf32>
    %198 = arith.negf %197 : vector<2x64xf32>
    %199 = math.exp %198 : vector<2x64xf32>
    %cst_30 = arith.constant 1.000000e+00 : f32
    %200 = vector.broadcast %cst_30 : f32 to vector<2x64xf32>
    %201 = arith.addf %200, %199 : vector<2x64xf32>
    %202 = arith.divf %200, %201 : vector<2x64xf32>
    %203 = vector.extract_strided_slice %202 {offsets = [0, 0], sizes = [2, 32], strides = [1, 1]} : vector<2x64xf32> to vector<2x32xf32>
    %204 = vector.extract_strided_slice %202 {offsets = [0, 32], sizes = [2, 32], strides = [1, 1]} : vector<2x64xf32> to vector<2x32xf32>
    %205 = vector.extract_strided_slice %192 {offsets = [0, 64], sizes = [2, 32], strides = [1, 1]} : vector<2x96xf32> to vector<2x32xf32>
    %206 = vector.extract_strided_slice %194 {offsets = [0, 64], sizes = [2, 32], strides = [1, 1]} : vector<2x96xf32> to vector<2x32xf32>
    %207 = arith.mulf %203, %206 : vector<2x32xf32>
    %208 = arith.addf %205, %207 : vector<2x32xf32>
    %209 = math.tanh %208 : vector<2x32xf32>
    %cst_31 = arith.constant 1.000000e+00 : f32
    %210 = vector.broadcast %cst_31 : f32 to vector<2x32xf32>
    %211 = arith.subf %210, %204 : vector<2x32xf32>
    %212 = arith.mulf %211, %209 : vector<2x32xf32>
    %213 = arith.mulf %204, %191 : vector<2x32xf32>
    %214 = arith.addf %212, %213 : vector<2x32xf32>
    %215 = vector.extract_strided_slice %15 {offsets = [14, 0], sizes = [2, 32], strides = [1, 1]} : vector<16x32xi1> to vector<2x32xi1>
    %216 = arith.select %215, %214, %191 : vector<2x32xi1>, vector<2x32xf32>
    %c1 = arith.constant 1 : index
    %c0_32 = arith.constant 0 : index
    %c0_33 = arith.constant 0 : index
    %217 = vector.load %arg2[%c1, %c0_32, %c0_33] : memref<2x56x96xf32, #tpu.memory_space<vmem>>, vector<1x56x96xf32>
    %218 = vector.shape_cast %217 : vector<1x56x96xf32> to vector<56x96xf32>
    %219 = vector.extract_strided_slice %218 {offsets = [0, 0], sizes = [16, 96], strides = [1, 1]} : vector<56x96xf32> to vector<16x96xf32>
    %220 = vector.extract_strided_slice %218 {offsets = [16, 0], sizes = [32, 96], strides = [1, 1]} : vector<56x96xf32> to vector<32x96xf32>
    %221 = vector.extract_strided_slice %218 {offsets = [48, 0], sizes = [1, 96], strides = [1, 1]} : vector<56x96xf32> to vector<1x96xf32>
    %222 = vector.extract_strided_slice %218 {offsets = [49, 0], sizes = [1, 96], strides = [1, 1]} : vector<56x96xf32> to vector<1x96xf32>
    %223 = vector.extract_strided_slice %8 {offsets = [16, 0], sizes = [16, 16], strides = [1, 1]} : vector<32x16xf32> to vector<16x16xf32>
    %cst_34 = arith.constant dense<0.000000e+00> : vector<16x96xf32>
    %224 = tpu.matmul %223, %219, %cst_34 {dimension_numbers = #tpu.dot_dimension_numbers<[1], [0], [0], [1], [0, 0, 1, 1], [], []>} : vector<16x16xf32>, vector<16x96xf32>, vector<16x96xf32> -> vector<16x96xf32>
    %225 = vector.broadcast %221 : vector<1x96xf32> to vector<16x96xf32>
    %226 = arith.addf %224, %225 : vector<16x96xf32>
    %cst_35 = arith.constant dense<0.000000e+00> : vector<2x96xf32>
    %227 = tpu.matmul %216, %220, %cst_35 {dimension_numbers = #tpu.dot_dimension_numbers<[1], [0], [0], [1], [0, 0, 1, 1], [], []>} : vector<2x32xf32>, vector<32x96xf32>, vector<2x96xf32> -> vector<2x96xf32>
    %228 = vector.broadcast %222 : vector<1x96xf32> to vector<2x96xf32>
    %229 = arith.addf %227, %228 : vector<2x96xf32>
    %230 = tpu.concatenate %229, %229, %229, %229, %229, %229, %229, %229 in 0 : vector<2x96xf32>, vector<2x96xf32>, vector<2x96xf32>, vector<2x96xf32>, vector<2x96xf32>, vector<2x96xf32>, vector<2x96xf32>, vector<2x96xf32> -> vector<16x96xf32>
    %231 = tpu.concatenate %216, %216, %216, %216, %216, %216, %216, %216 in 0 : vector<2x32xf32>, vector<2x32xf32>, vector<2x32xf32>, vector<2x32xf32>, vector<2x32xf32>, vector<2x32xf32>, vector<2x32xf32>, vector<2x32xf32> -> vector<16x32xf32>
    %232 = vector.extract_strided_slice %226 {offsets = [0, 0], sizes = [16, 64], strides = [1, 1]} : vector<16x96xf32> to vector<16x64xf32>
    %233 = vector.extract_strided_slice %230 {offsets = [0, 0], sizes = [16, 64], strides = [1, 1]} : vector<16x96xf32> to vector<16x64xf32>
    %234 = arith.addf %232, %233 : vector<16x64xf32>
    %235 = arith.negf %234 : vector<16x64xf32>
    %236 = math.exp %235 : vector<16x64xf32>
    %cst_36 = arith.constant 1.000000e+00 : f32
    %237 = vector.broadcast %cst_36 : f32 to vector<16x64xf32>
    %238 = arith.addf %237, %236 : vector<16x64xf32>
    %239 = arith.divf %237, %238 : vector<16x64xf32>
    %240 = vector.extract_strided_slice %239 {offsets = [0, 0], sizes = [16, 32], strides = [1, 1]} : vector<16x64xf32> to vector<16x32xf32>
    %241 = vector.extract_strided_slice %239 {offsets = [0, 32], sizes = [16, 32], strides = [1, 1]} : vector<16x64xf32> to vector<16x32xf32>
    %242 = vector.extract_strided_slice %226 {offsets = [0, 64], sizes = [16, 32], strides = [1, 1]} : vector<16x96xf32> to vector<16x32xf32>
    %243 = vector.extract_strided_slice %230 {offsets = [0, 64], sizes = [16, 32], strides = [1, 1]} : vector<16x96xf32> to vector<16x32xf32>
    %244 = arith.mulf %240, %243 : vector<16x32xf32>
    %245 = arith.addf %242, %244 : vector<16x32xf32>
    %246 = math.tanh %245 : vector<16x32xf32>
    %cst_37 = arith.constant 1.000000e+00 : f32
    %247 = vector.broadcast %cst_37 : f32 to vector<16x32xf32>
    %248 = arith.subf %247, %241 : vector<16x32xf32>
    %249 = arith.mulf %248, %246 : vector<16x32xf32>
    %250 = arith.mulf %241, %231 : vector<16x32xf32>
    %251 = arith.addf %249, %250 : vector<16x32xf32>
    %c0_38 = arith.constant 0 : index
    %c0_39 = arith.constant 0 : index
    %252 = vector.load %arg3[%c0_38, %c0_39] : memref<33x128xf32, #tpu.memory_space<vmem>>, vector<33x128xf32>
    %253 = vector.extract_strided_slice %252 {offsets = [0, 0], sizes = [32, 128], strides = [1, 1]} : vector<33x128xf32> to vector<32x128xf32>
    %cst_40 = arith.constant dense<0.000000e+00> : vector<16x128xf32>
    %254 = tpu.matmul %251, %253, %cst_40 {dimension_numbers = #tpu.dot_dimension_numbers<[1], [0], [0], [1], [0, 0, 1, 1], [], []>} : vector<16x32xf32>, vector<32x128xf32>, vector<16x128xf32> -> vector<16x128xf32>
    %255 = vector.extract_strided_slice %252 {offsets = [32, 0], sizes = [1, 128], strides = [1, 1]} : vector<33x128xf32> to vector<1x128xf32>
    %256 = vector.broadcast %255 : vector<1x128xf32> to vector<16x128xf32>
    %257 = arith.addf %254, %256 : vector<16x128xf32>
    %c0_41 = arith.constant 0 : index
    %c0_42 = arith.constant 0 : index
    %258 = vector.load %arg4[%c0_41, %c0_42] : memref<16x128xf32, #tpu.memory_space<vmem>>, vector<16x128xf32>
    tpu.vector_store %arg4[%c0_41, %c0_42], %257 {strides = array<i32>} : memref<16x128xf32, #tpu.memory_space<vmem>>, vector<16x128xf32>,
    return
  }
}

</mosaic_0001>

<llo_original>
// kernel: tpu_custom_call.1
$region0: #{tpu_custom_call.1}
  #allocation0 [shape = 'u32[]', space=smem, size = 0x4, offset = 0x4, fixed_abs, tag = 'smem constant byte address 0x4 - core index']
  #allocation1 [shape = 'u32[72,128]{1,0:T(1,128)}', space=vmem, size = 0x9000, scoped, tag = 'internal scratch']
  %s0 = inlined_call_operand.vmem [shape: f32[32,16], index: 0, kind: input, shape index: {}]
  %s1 = inlined_call_operand.hbm [shape: f32[16,32], index: 1, kind: input, shape index: {}]
  %s2 = inlined_call_operand.hbm [shape: f32[2,56,96], index: 2, kind: input, shape index: {}]
  %s3 = inlined_call_operand.vmem [shape: f32[33,128], index: 3, kind: input, shape index: {}]
  %s4 = inlined_call_operand.hbm [shape: f32[16,128], index: 4, kind: output, shape index: {}]
  %s5 = sld [smem:[#allocation0]]
  $region34: #{tpu_custom_call.1} parent=0
    _
  %s7 = ssub.s32 1, %s5
  %s8 = scalar_select 0, %s7, %s5
  $region1: #{tpu_custom_call.1} parent=0
    #allocation2 [shape = 'u8[8192]{0}', space=vmem, size = 0x2000, scoped, tag = 'input window, operand 1, single buffered']
    #allocation3 [shape = 's32[1]{0}', space=sflag, size = 0x4, scoped, tag = 'scoped memory for tpu_custom_call.1']
    #allocation4 [shape = 's32[1]{0}', space=sflag, size = 0x4, scoped, tag = 'scoped memory for tpu_custom_call.1']
    #allocation5 [shape = 'u8[57344]{0}', space=vmem, size = 0xe000, scoped, tag = 'input window, operand 2, single buffered']
    #allocation6 [shape = 's32[1]{0}', space=sflag, size = 0x4, scoped, tag = 'scoped memory for tpu_custom_call.1']
    #allocation7 [shape = 'u8[8192]{0}', space=vmem, size = 0x2000, scoped, tag = 'output window, operand 0, single buffered']
    %9 = vsyncpa [#allocation3], 0
    %10 = vsyncpa [#allocation6], 0
    %11 = vsyncpa [#allocation4], 0
    // Predicated region
    $region2: #{tpu_custom_call.1} parent=1 // pred_check
      _
    $region3: #{tpu_custom_call.1} parent=1 // pred_check_branch
      %13 = sbr.rel (0) target = $region5
    $region4: #{tpu_custom_call.1} parent=1 // pred_region
      _
    $region5: #{tpu_custom_call.1} parent=1 // pred_fallthru
      _
    // Predicated region
    $region6: #{tpu_custom_call.1} parent=1 // pred_check
      _
    $region7: #{tpu_custom_call.1} parent=1 // pred_check_branch
      %15 = sbr.rel (0) target = $region9
    $region8: #{tpu_custom_call.1} parent=1 // pred_region
      %17 = vsyncadd [#allocation3], 0
      %s18 = sshll.u32 %s1, 4
      %s19 = int_to_ptr.hbm [resolvable:$true] %s18
      %s20 = sshll.u32 [#allocation2], 4
      %s21 = int_to_ptr.vmem [resolvable:$true] %s20
      %26 = dma.hbm_to_vmem [thread:$0]  %s19, 256, %s21, [#allocation3], 128, 128, 8
    $region9: #{tpu_custom_call.1} parent=1 // pred_fallthru
      _
    // Predicated region
    $region10: #{tpu_custom_call.1} parent=1 // pred_check
      _
    $region11: #{tpu_custom_call.1} parent=1 // pred_check_branch
      %28 = sbr.rel (0) target = $region13
    $region12: #{tpu_custom_call.1} parent=1 // pred_region
      %30 = vsyncadd [#allocation6], 0
      %s31 = sshll.u32 %s2, 4
      %s32 = int_to_ptr.hbm [resolvable:$true] %s31
      %s33 = sshll.u32 [#allocation5], 4
      %s34 = int_to_ptr.vmem [resolvable:$true] %s33
      %39 = dma.hbm_to_vmem [thread:$0]  %s32, 1792, %s34, [#allocation6], 128, 128, 8
    $region13: #{tpu_custom_call.1} parent=1 // pred_fallthru
      _
    // Predicated region
    $region14: #{tpu_custom_call.1} parent=1 // pred_check
      _
    $region15: #{tpu_custom_call.1} parent=1 // pred_check_branch
      %41 = sbr.rel (0) target = $region17
    $region16: #{tpu_custom_call.1} parent=1 // pred_region
      _
    $region17: #{tpu_custom_call.1} parent=1 // pred_fallthru
      _
    // Predicated region
    $region18: #{tpu_custom_call.1} parent=1 // pred_check
      _
    $region19: #{tpu_custom_call.1} parent=1 // pred_check_branch
      %43 = sbr.rel (0) target = $region21
    $region20: #{tpu_custom_call.1} parent=1 // pred_region
      %45 = dma.done [#allocation3], 256
    $region21: #{tpu_custom_call.1} parent=1 // pred_fallthru
      _
    // Predicated region
    $region22: #{tpu_custom_call.1} parent=1 // pred_check
      _
    $region23: #{tpu_custom_call.1} parent=1 // pred_check_branch
      %47 = sbr.rel (0) target = $region25
    $region24: #{tpu_custom_call.1} parent=1 // pred_region
      %49 = dma.done [#allocation6], 1792
    $region25: #{tpu_custom_call.1} parent=1 // pred_fallthru
      _
    %v50 = vld [vmem:[#allocation5] sm:$0xff]
    %v51 = vld [vmem:[#allocation5 + $0x8] sm:$0xff]
    %v52 = vld [vmem:[#allocation5 + $0x10] sm:$0xff]
    %v53 = vld [vmem:[#allocation5 + $0x18] sm:$0xff]
    %v54 = vld [vmem:[#allocation5 + $0x20] sm:$0xff]
    %v55 = vld [vmem:[#allocation5 + $0x28] sm:$0xff]
    %v56 = vld [vmem:[#allocation5 + $0x30] sm:$0xff]
    %v57 = vperm.slane %v56, 1
    %v58 = vld [vmem:[%s0] sm:$0xff]
    %v59 = vld [vmem:[%s0 + $0x8] sm:$0xff]
    %v60 = vld [vmem:[%s0 + $0x10] sm:$0xff]
    %v61 = vld [vmem:[%s0 + $0x18] sm:$0xff]
    %v62 = vperm.slane %v56, 0
    %vm63 = vcmask 130048
    %v65 = vsel %vm63, %v58, 0
    %v68 = vsel %vm63, %v59, 0
    %70 = vmatpush.msra.mxu0 0.0
    %71 = vmatpush.msra.mxu0 0.0
    %72 = vmatpush.msra.mxu0 0.0
    %73 = vmatpush.msra.mxu0 0.0
    %74 = vmatpush.msra.mxu0 0.0
    %75 = vmatpush.msra.mxu0 0.0
    %76 = vmatpush.msra.mxu0 0.0
    %77 = vmatpush.msra.mxu0 0.0
    %78 = vmatpush.msra.mxu0 0.0
    %79 = vmatpush.msra.mxu0 0.0
    %80 = vmatpush.msra.mxu0 0.0
    %81 = vmatpush.msra.mxu0 0.0
    %82 = vmatpush.msra.mxu0 0.0
    %83 = vmatpush.msra.mxu0 0.0
    %84 = vmatpush.msra.mxu0 %v51
    %85 = vmatpush.msra.mxu0 %v50
    %86 = vmatmul.f32.gmra.mxu0 %v65
    %v87 = vpop.f32.mrf.mxu0
    %v88 = vadd.f32 %v62, %v87
    %89 = vmatmul.f32.gmra.mxu0 %v68
    %v90 = vpop.f32.mrf.mxu0
    %v91 = vadd.f32 %v62, %v90
    %92 = vdwg.mxu0
    %v93 = vld [vmem:[#allocation2] sm:$0xff]
    %v94 = vld [vmem:[#allocation2 + $0x8] sm:$0xff]
    %vm95 = vcmp.ne.f32.partialorder %v93, 0.0
    %vm96 = vcmp.ne.f32.partialorder %v94, 0.0
    %vm97 = vcmask 261120
    %v99 = vsel %vm97, 0.0, 0
    %101 = vmatpush.msra.mxu0 0.0
    %102 = vmatpush.msra.mxu0 0.0
    %103 = vmatpush.msra.mxu0 0.0
    %104 = vmatpush.msra.mxu0 0.0
    %105 = vmatpush.msra.mxu0 0.0
    %106 = vmatpush.msra.mxu0 0.0
    %107 = vmatpush.msra.mxu0 0.0
    %108 = vmatpush.msra.mxu0 0.0
    %109 = vmatpush.msra.mxu0 0.0
    %110 = vmatpush.msra.mxu0 0.0
    %111 = vmatpush.msra.mxu0 0.0
    %112 = vmatpush.msra.mxu0 0.0
    %113 = vmatpush.msra.mxu0 %v55
    %114 = vmatpush.msra.mxu0 %v54
    %115 = vmatpush.msra.mxu0 %v53
    %116 = vmatpush.msra.mxu0 %v52
    %117 = vmatmul.f32.gmra.mxu0 %v99
    %v118 = vpop.f32.mrf.mxu0
    %v119 = vadd.f32 %v57, %v118
    %120 = vdwg.mxu0
    %v121 = vadd.f32 %v88, %v119
    %v122 = vxor.u32 %v121, 2147483648
    %v123 = vmul.f32 %v122, 1.442695
    %v124 = vpow.pop %v123
    %v125 = vadd.f32 %v124, 1.0
    %v126 = vrcp.pop %v125
    %v127 = vmul.f32 %v125, %v126
    %v128 = vsub.f32 1.0, %v127
    %v129 = vmul.f32 %v126, %v128
    %v130 = vadd.f32 %v126, %v129
    %vm131 = vweird.f32 %v125
    %vm132 = vweird.f32 %v126
    %vm133 = vmor %vm131, %vm132
    %v134 = vsel %vm133, %v126, %v130
    %v135 = vand.u32 2147483647, %v125
    %vm136 = vcmp.eq.f32.partialorder %v135, 8.507059e+37
    %v137 = vand.u32 %v125, 2147483648
    %v138 = vor.u32 1.1754944e-38, %v137
    %v139 = vsel %vm136, %v138, %v134
    %v140 = vmul.f32 1.0, %v139
    %142 = vrot.lane.b32.xlu0 %v119, 64
    %v143 = vpop.permute.xlu0 %142
    %v145 = vmul.f32 %v140, %v143
    %147 = vrot.lane.b32.xlu0 %v145, 64
    %v148 = vpop.permute.xlu0 %147
    %v150 = vadd.f32 %v88, %v148
    %v151 = vtanh.pop %v150
    %v152 = vsub.f32 1.0, %v140
    %154 = vrot.lane.b32.xlu0 %v151, 96
    %v155 = vpop.permute.xlu0 %154
    %v157 = vmul.f32 %v152, %v155
    %v158 = vmul.f32 %v140, 0.0
    %v159 = vadd.f32 %v157, %v158
    %161 = vrot.lane.b32.xlu0 %v159, 96
    %v162 = vpop.permute.xlu0 %161
    %v164 = vsel %vm95, %v162, 0.0
    %v166 = vsel %vm97, %v164, 0
    %168 = vmatpush.msra.mxu0 0.0
    %169 = vmatpush.msra.mxu0 0.0
    %170 = vmatpush.msra.mxu0 0.0
    %171 = vmatpush.msra.mxu0 0.0
    %172 = vmatpush.msra.mxu0 0.0
    %173 = vmatpush.msra.mxu0 0.0
    %174 = vmatpush.msra.mxu0 0.0
    %175 = vmatpush.msra.mxu0 0.0
    %176 = vmatpush.msra.mxu0 0.0
    %177 = vmatpush.msra.mxu0 0.0
    %178 = vmatpush.msra.mxu0 0.0
    %179 = vmatpush.msra.mxu0 0.0
    %180 = vmatpush.msra.mxu0 %v55
    %181 = vmatpush.msra.mxu0 %v54
    %182 = vmatpush.msra.mxu0 %v53
    %183 = vmatpush.msra.mxu0 %v52
    %184 = vmatmul.f32.gmra.mxu0 %v166
    %v185 = vpop.f32.mrf.mxu0
    %v186 = vadd.f32 %v57, %v185
    %187 = vdwg.mxu0
    %v189 = vrot.slane %v186, 6
    %v191 = vadd.f32 %v88, %v189
    %v192 = vxor.u32 %v191, 2147483648
    %v193 = vmul.f32 %v192, 1.442695
    %v194 = vpow.pop %v193
    %v195 = vadd.f32 %v194, 1.0
    %v196 = vrcp.pop %v195
    %v197 = vmul.f32 %v195, %v196
    %v198 = vsub.f32 1.0, %v197
    %v199 = vmul.f32 %v196, %v198
    %v200 = vadd.f32 %v196, %v199
    %vm201 = vweird.f32 %v195
    %vm202 = vweird.f32 %v196
    %vm203 = vmor %vm201, %vm202
    %v204 = vsel %vm203, %v196, %v200
    %v205 = vand.u32 2147483647, %v195
    %vm206 = vcmp.eq.f32.partialorder %v205, 8.507059e+37
    %v207 = vand.u32 %v195, 2147483648
    %v208 = vor.u32 1.1754944e-38, %v207
    %v209 = vsel %vm206, %v208, %v204
    %v210 = vmul.f32 1.0, %v209
    %211 = vrot.lane.b32.xlu0 %v189, 64
    %v212 = vpop.permute.xlu0 %211
    %v214 = vmul.f32 %v210, %v212
    %216 = vrot.lane.b32.xlu0 %v214, 64
    %v217 = vpop.permute.xlu0 %216
    %v219 = vadd.f32 %v88, %v217
    %v220 = vtanh.pop %v219
    %v221 = vsub.f32 1.0, %v210
    %223 = vrot.lane.b32.xlu0 %v220, 96
    %v224 = vpop.permute.xlu0 %223
    %v226 = vmul.f32 %v221, %v224
    %v227 = vrot.slane %v164, 6
    %228 = vrot.lane.b32.xlu0 %v227, 32
    %v229 = vpop.permute.xlu0 %228
    %v231 = vmul.f32 %v210, %v229
    %v232 = vadd.f32 %v226, %v231
    %234 = vrot.lane.b32.xlu0 %v232, 96
    %v235 = vpop.permute.xlu0 %234
    %v238 = vsel %vm95, %v235, %v227
    %v240 = vrot.slane %v238, 2
    %v241 = vsel %vm97, %v240, 0
    %243 = vmatpush.msra.mxu0 0.0
    %244 = vmatpush.msra.mxu0 0.0
    %245 = vmatpush.msra.mxu0 0.0
    %246 = vmatpush.msra.mxu0 0.0
    %247 = vmatpush.msra.mxu0 0.0
    %248 = vmatpush.msra.mxu0 0.0
    %249 = vmatpush.msra.mxu0 0.0
    %250 = vmatpush.msra.mxu0 0.0
    %251 = vmatpush.msra.mxu0 0.0
    %252 = vmatpush.msra.mxu0 0.0
    %253 = vmatpush.msra.mxu0 0.0
    %254 = vmatpush.msra.mxu0 0.0
    %255 = vmatpush.msra.mxu0 %v55
    %256 = vmatpush.msra.mxu0 %v54
    %257 = vmatpush.msra.mxu0 %v53
    %258 = vmatpush.msra.mxu0 %v52
    %259 = vmatmul.f32.gmra.mxu0 %v241
    %v260 = vpop.f32.mrf.mxu0
    %v261 = vadd.f32 %v57, %v260
    %262 = vdwg.mxu0
    %v264 = vrot.slane %v261, 4
    %v266 = vadd.f32 %v88, %v264
    %v267 = vxor.u32 %v266, 2147483648
    %v268 = vmul.f32 %v267, 1.442695
    %v269 = vpow.pop %v268
    %v270 = vadd.f32 %v269, 1.0
    %v271 = vrcp.pop %v270
    %v272 = vmul.f32 %v270, %v271
    %v273 = vsub.f32 1.0, %v272
    %v274 = vmul.f32 %v271, %v273
    %v275 = vadd.f32 %v271, %v274
    %vm276 = vweird.f32 %v270
    %vm277 = vweird.f32 %v271
    %vm278 = vmor %vm276, %vm277
    %v279 = vsel %vm278, %v271, %v275
    %v280 = vand.u32 2147483647, %v270
    %vm281 = vcmp.eq.f32.partialorder %v280, 8.507059e+37
    %v282 = vand.u32 %v270, 2147483648
    %v283 = vor.u32 1.1754944e-38, %v282
    %v284 = vsel %vm281, %v283, %v279
    %v285 = vmul.f32 1.0, %v284
    %286 = vrot.lane.b32.xlu0 %v264, 64
    %v287 = vpop.permute.xlu0 %286
    %v289 = vmul.f32 %v285, %v287
    %291 = vrot.lane.b32.xlu0 %v289, 64
    %v292 = vpop.permute.xlu0 %291
    %v294 = vadd.f32 %v88, %v292
    %v295 = vtanh.pop %v294
    %v296 = vsub.f32 1.0, %v285
    %298 = vrot.lane.b32.xlu0 %v295, 96
    %v299 = vpop.permute.xlu0 %298
    %v301 = vmul.f32 %v296, %v299
    %v302 = vrot.slane %v238, 6
    %303 = vrot.lane.b32.xlu0 %v302, 32
    %v304 = vpop.permute.xlu0 %303
    %v306 = vmul.f32 %v285, %v304
    %v307 = vadd.f32 %v301, %v306
    %309 = vrot.lane.b32.xlu0 %v307, 96
    %v310 = vpop.permute.xlu0 %309
    %v313 = vsel %vm95, %v310, %v302
    %v315 = vrot.slane %v313, 4
    %v316 = vsel %vm97, %v315, 0
    %318 = vmatpush.msra.mxu0 0.0
    %319 = vmatpush.msra.mxu0 0.0
    %320 = vmatpush.msra.mxu0 0.0
    %321 = vmatpush.msra.mxu0 0.0
    %322 = vmatpush.msra.mxu0 0.0
    %323 = vmatpush.msra.mxu0 0.0
    %324 = vmatpush.msra.mxu0 0.0
    %325 = vmatpush.msra.mxu0 0.0
    %326 = vmatpush.msra.mxu0 0.0
    %327 = vmatpush.msra.mxu0 0.0
    %328 = vmatpush.msra.mxu0 0.0
    %329 = vmatpush.msra.mxu0 0.0
    %330 = vmatpush.msra.mxu0 %v55
    %331 = vmatpush.msra.mxu0 %v54
    %332 = vmatpush.msra.mxu0 %v53
    %333 = vmatpush.msra.mxu0 %v52
    %334 = vmatmul.f32.gmra.mxu0 %v316
    %v335 = vpop.f32.mrf.mxu0
    %v336 = vadd.f32 %v57, %v335
    %337 = vdwg.mxu0
    %v339 = vrot.slane %v336, 2
    %v341 = vadd.f32 %v88, %v339
    %v342 = vxor.u32 %v341, 2147483648
    %v343 = vmul.f32 %v342, 1.442695
    %v344 = vpow.pop %v343
    %v345 = vadd.f32 %v344, 1.0
    %v346 = vrcp.pop %v345
    %v347 = vmul.f32 %v345, %v346
    %v348 = vsub.f32 1.0, %v347
    %v349 = vmul.f32 %v346, %v348
    %v350 = vadd.f32 %v346, %v349
    %vm351 = vweird.f32 %v345
    %vm352 = vweird.f32 %v346
    %vm353 = vmor %vm351, %vm352
    %v354 = vsel %vm353, %v346, %v350
    %v355 = vand.u32 2147483647, %v345
    %vm356 = vcmp.eq.f32.partialorder %v355, 8.507059e+37
    %v357 = vand.u32 %v345, 2147483648
    %v358 = vor.u32 1.1754944e-38, %v357
    %v359 = vsel %vm356, %v358, %v354
    %v360 = vmul.f32 1.0, %v359
    %361 = vrot.lane.b32.xlu0 %v339, 64
    %v362 = vpop.permute.xlu0 %361
    %v364 = vmul.f32 %v360, %v362
    %366 = vrot.lane.b32.xlu0 %v364, 64
    %v367 = vpop.permute.xlu0 %366
    %v369 = vadd.f32 %v88, %v367
    %v370 = vtanh.pop %v369
    %v371 = vsub.f32 1.0, %v360
    %373 = vrot.lane.b32.xlu0 %v370, 96
    %v374 = vpop.permute.xlu0 %373
    %v376 = vmul.f32 %v371, %v374
    %v377 = vrot.slane %v313, 6
    %378 = vrot.lane.b32.xlu0 %v377, 32
    %v379 = vpop.permute.xlu0 %378
    %v381 = vmul.f32 %v360, %v379
    %v382 = vadd.f32 %v376, %v381
    %384 = vrot.lane.b32.xlu0 %v382, 96
    %v385 = vpop.permute.xlu0 %384
    %v388 = vsel %vm95, %v385, %v377
    %v390 = vrot.slane %v388, 6
    %v391 = vsel %vm97, %v390, 0
    %393 = vmatpush.msra.mxu0 0.0
    %394 = vmatpush.msra.mxu0 0.0
    %395 = vmatpush.msra.mxu0 0.0
    %396 = vmatpush.msra.mxu0 0.0
    %397 = vmatpush.msra.mxu0 0.0
    %398 = vmatpush.msra.mxu0 0.0
    %399 = vmatpush.msra.mxu0 0.0
    %400 = vmatpush.msra.mxu0 0.0
    %401 = vmatpush.msra.mxu0 0.0
    %402 = vmatpush.msra.mxu0 0.0
    %403 = vmatpush.msra.mxu0 0.0
    %404 = vmatpush.msra.mxu0 0.0
    %405 = vmatpush.msra.mxu0 %v55
    %406 = vmatpush.msra.mxu0 %v54
    %407 = vmatpush.msra.mxu0 %v53
    %408 = vmatpush.msra.mxu0 %v52
    %409 = vmatmul.f32.gmra.mxu0 %v391
    %v410 = vpop.f32.mrf.mxu0
    %v411 = vadd.f32 %v57, %v410
    %412 = vdwg.mxu0
    %v413 = vadd.f32 %v91, %v411
    %v414 = vxor.u32 %v413, 2147483648
    %v415 = vmul.f32 %v414, 1.442695
    %v416 = vpow.pop %v415
    %v417 = vadd.f32 %v416, 1.0
    %v418 = vrcp.pop %v417
    %v419 = vmul.f32 %v417, %v418
    %v420 = vsub.f32 1.0, %v419
    %v421 = vmul.f32 %v418, %v420
    %v422 = vadd.f32 %v418, %v421
    %vm423 = vweird.f32 %v417
    %vm424 = vweird.f32 %v418
    %vm425 = vmor %vm423, %vm424
    %v426 = vsel %vm425, %v418, %v422
    %v427 = vand.u32 2147483647, %v417
    %vm428 = vcmp.eq.f32.partialorder %v427, 8.507059e+37
    %v429 = vand.u32 %v417, 2147483648
    %v430 = vor.u32 1.1754944e-38, %v429
    %v431 = vsel %vm428, %v430, %v426
    %v432 = vmul.f32 1.0, %v431
    %434 = vrot.lane.b32.xlu0 %v411, 64
    %v435 = vpop.permute.xlu0 %434
    %v437 = vmul.f32 %v432, %v435
    %439 = vrot.lane.b32.xlu0 %v437, 64
    %v440 = vpop.permute.xlu0 %439
    %v442 = vadd.f32 %v91, %v440
    %v443 = vtanh.pop %v442
    %v444 = vsub.f32 1.0, %v432
    %446 = vrot.lane.b32.xlu0 %v443, 96
    %v447 = vpop.permute.xlu0 %446
    %v449 = vmul.f32 %v444, %v447
    %450 = vrot.lane.b32.xlu0 %v390, 32
    %v451 = vpop.permute.xlu0 %450
    %v453 = vmul.f32 %v432, %v451
    %v454 = vadd.f32 %v449, %v453
    %456 = vrot.lane.b32.xlu0 %v454, 96
    %v457 = vpop.permute.xlu0 %456
    %v460 = vsel %vm96, %v457, %v390
    %v462 = vsel %vm97, %v460, 0
    %464 = vmatpush.msra.mxu0 0.0
    %465 = vmatpush.msra.mxu0 0.0
    %466 = vmatpush.msra.mxu0 0.0
    %467 = vmatpush.msra.mxu0 0.0
    %468 = vmatpush.msra.mxu0 0.0
    %469 = vmatpush.msra.mxu0 0.0
    %470 = vmatpush.msra.mxu0 0.0
    %471 = vmatpush.msra.mxu0 0.0
    %472 = vmatpush.msra.mxu0 0.0
    %473 = vmatpush.msra.mxu0 0.0
    %474 = vmatpush.msra.mxu0 0.0
    %475 = vmatpush.msra.mxu0 0.0
    %476 = vmatpush.msra.mxu0 %v55
    %477 = vmatpush.msra.mxu0 %v54
    %478 = vmatpush.msra.mxu0 %v53
    %479 = vmatpush.msra.mxu0 %v52
    %480 = vmatmul.f32.gmra.mxu0 %v462
    %v481 = vpop.f32.mrf.mxu0
    %v482 = vadd.f32 %v57, %v481
    %483 = vdwg.mxu0
    %v485 = vrot.slane %v482, 6
    %v487 = vadd.f32 %v91, %v485
    %v488 = vxor.u32 %v487, 2147483648
    %v489 = vmul.f32 %v488, 1.442695
    %v490 = vpow.pop %v489
    %v491 = vadd.f32 %v490, 1.0
    %v492 = vrcp.pop %v491
    %v493 = vmul.f32 %v491, %v492
    %v494 = vsub.f32 1.0, %v493
    %v495 = vmul.f32 %v492, %v494
    %v496 = vadd.f32 %v492, %v495
    %vm497 = vweird.f32 %v491
    %vm498 = vweird.f32 %v492
    %vm499 = vmor %vm497, %vm498
    %v500 = vsel %vm499, %v492, %v496
    %v501 = vand.u32 2147483647, %v491
    %vm502 = vcmp.eq.f32.partialorder %v501, 8.507059e+37
    %v503 = vand.u32 %v491, 2147483648
    %v504 = vor.u32 1.1754944e-38, %v503
    %v505 = vsel %vm502, %v504, %v500
    %v506 = vmul.f32 1.0, %v505
    %507 = vrot.lane.b32.xlu0 %v485, 64
    %v508 = vpop.permute.xlu0 %507
    %v510 = vmul.f32 %v506, %v508
    %512 = vrot.lane.b32.xlu0 %v510, 64
    %v513 = vpop.permute.xlu0 %512
    %v515 = vadd.f32 %v91, %v513
    %v516 = vtanh.pop %v515
    %v517 = vsub.f32 1.0, %v506
    %519 = vrot.lane.b32.xlu0 %v516, 96
    %v520 = vpop.permute.xlu0 %519
    %v522 = vmul.f32 %v517, %v520
    %v523 = vrot.slane %v460, 6
    %524 = vrot.lane.b32.xlu0 %v523, 32
    %v525 = vpop.permute.xlu0 %524
    %v527 = vmul.f32 %v506, %v525
    %v528 = vadd.f32 %v522, %v527
    %530 = vrot.lane.b32.xlu0 %v528, 96
    %v531 = vpop.permute.xlu0 %530
    %v534 = vsel %vm96, %v531, %v523
    %v536 = vrot.slane %v534, 2
    %v537 = vsel %vm97, %v536, 0
    %539 = vmatpush.msra.mxu0 0.0
    %540 = vmatpush.msra.mxu0 0.0
    %541 = vmatpush.msra.mxu0 0.0
    %542 = vmatpush.msra.mxu0 0.0
    %543 = vmatpush.msra.mxu0 0.0
    %544 = vmatpush.msra.mxu0 0.0
    %545 = vmatpush.msra.mxu0 0.0
    %546 = vmatpush.msra.mxu0 0.0
    %547 = vmatpush.msra.mxu0 0.0
    %548 = vmatpush.msra.mxu0 0.0
    %549 = vmatpush.msra.mxu0 0.0
    %550 = vmatpush.msra.mxu0 0.0
    %551 = vmatpush.msra.mxu0 %v55
    %552 = vmatpush.msra.mxu0 %v54
    %553 = vmatpush.msra.mxu0 %v53
    %554 = vmatpush.msra.mxu0 %v52
    %555 = vmatmul.f32.gmra.mxu0 %v537
    %v556 = vpop.f32.mrf.mxu0
    %v557 = vadd.f32 %v57, %v556
    %558 = vdwg.mxu0
    %v560 = vrot.slane %v557, 4
    %v562 = vadd.f32 %v91, %v560
    %v563 = vxor.u32 %v562, 2147483648
    %v564 = vmul.f32 %v563, 1.442695
    %v565 = vpow.pop %v564
    %v566 = vadd.f32 %v565, 1.0
    %v567 = vrcp.pop %v566
    %v568 = vmul.f32 %v566, %v567
    %v569 = vsub.f32 1.0, %v568
    %v570 = vmul.f32 %v567, %v569
    %v571 = vadd.f32 %v567, %v570
    %vm572 = vweird.f32 %v566
    %vm573 = vweird.f32 %v567
    %vm574 = vmor %vm572, %vm573
    %v575 = vsel %vm574, %v567, %v571
    %v576 = vand.u32 2147483647, %v566
    %vm577 = vcmp.eq.f32.partialorder %v576, 8.507059e+37
    %v578 = vand.u32 %v566, 2147483648
    %v579 = vor.u32 1.1754944e-38, %v578
    %v580 = vsel %vm577, %v579, %v575
    %v581 = vmul.f32 1.0, %v580
    %582 = vrot.lane.b32.xlu0 %v560, 64
    %v583 = vpop.permute.xlu0 %582
    %v585 = vmul.f32 %v581, %v583
    %587 = vrot.lane.b32.xlu0 %v585, 64
    %v588 = vpop.permute.xlu0 %587
    %v590 = vadd.f32 %v91, %v588
    %v591 = vtanh.pop %v590
    %v592 = vsub.f32 1.0, %v581
    %594 = vrot.lane.b32.xlu0 %v591, 96
    %v595 = vpop.permute.xlu0 %594
    %v597 = vmul.f32 %v592, %v595
    %v598 = vrot.slane %v534, 6
    %599 = vrot.lane.b32.xlu0 %v598, 32
    %v600 = vpop.permute.xlu0 %599
    %v602 = vmul.f32 %v581, %v600
    %v603 = vadd.f32 %v597, %v602
    %605 = vrot.lane.b32.xlu0 %v603, 96
    %v606 = vpop.permute.xlu0 %605
    %v609 = vsel %vm96, %v606, %v598
    %v611 = vrot.slane %v609, 4
    %v612 = vsel %vm97, %v611, 0
    %614 = vmatpush.msra.mxu0 0.0
    %615 = vmatpush.msra.mxu0 0.0
    %616 = vmatpush.msra.mxu0 0.0
    %617 = vmatpush.msra.mxu0 0.0
    %618 = vmatpush.msra.mxu0 0.0
    %619 = vmatpush.msra.mxu0 0.0
    %620 = vmatpush.msra.mxu0 0.0
    %621 = vmatpush.msra.mxu0 0.0
    %622 = vmatpush.msra.mxu0 0.0
    %623 = vmatpush.msra.mxu0 0.0
    %624 = vmatpush.msra.mxu0 0.0
    %625 = vmatpush.msra.mxu0 0.0
    %626 = vmatpush.msra.mxu0 %v55
    %627 = vmatpush.msra.mxu0 %v54
    %628 = vmatpush.msra.mxu0 %v53
    %629 = vmatpush.msra.mxu0 %v52
    %630 = vmatmul.f32.gmra.mxu0 %v612
    %v631 = vpop.f32.mrf.mxu0
    %v632 = vadd.f32 %v57, %v631
    %633 = vdwg.mxu0
    %v635 = vrot.slane %v632, 2
    %v637 = vadd.f32 %v91, %v635
    %v638 = vxor.u32 %v637, 2147483648
    %v639 = vmul.f32 %v638, 1.442695
    %v640 = vpow.pop %v639
    %v641 = vadd.f32 %v640, 1.0
    %v642 = vrcp.pop %v641
    %v643 = vmul.f32 %v641, %v642
    %v644 = vsub.f32 1.0, %v643
    %v645 = vmul.f32 %v642, %v644
    %v646 = vadd.f32 %v642, %v645
    %vm647 = vweird.f32 %v641
    %vm648 = vweird.f32 %v642
    %vm649 = vmor %vm647, %vm648
    %v650 = vsel %vm649, %v642, %v646
    %v651 = vand.u32 2147483647, %v641
    %vm652 = vcmp.eq.f32.partialorder %v651, 8.507059e+37
    %v653 = vand.u32 %v641, 2147483648
    %v654 = vor.u32 1.1754944e-38, %v653
    %v655 = vsel %vm652, %v654, %v650
    %v656 = vmul.f32 1.0, %v655
    %657 = vrot.lane.b32.xlu0 %v635, 64
    %v658 = vpop.permute.xlu0 %657
    %v660 = vmul.f32 %v656, %v658
    %662 = vrot.lane.b32.xlu0 %v660, 64
    %v663 = vpop.permute.xlu0 %662
    %v665 = vadd.f32 %v91, %v663
    %v666 = vtanh.pop %v665
    %v667 = vsub.f32 1.0, %v656
    %669 = vrot.lane.b32.xlu0 %v666, 96
    %v670 = vpop.permute.xlu0 %669
    %v672 = vmul.f32 %v667, %v670
    %v673 = vrot.slane %v609, 6
    %674 = vrot.lane.b32.xlu0 %v673, 32
    %v675 = vpop.permute.xlu0 %674
    %v677 = vmul.f32 %v656, %v675
    %v678 = vadd.f32 %v672, %v677
    %680 = vrot.lane.b32.xlu0 %v678, 96
    %v681 = vpop.permute.xlu0 %680
    %v684 = vsel %vm96, %v681, %v673
    %s685 = scalar_lea.vmem [#allocation5], 56
    %v686 = vld [vmem:[%s685] sm:$0xff]
    %v687 = vld [vmem:[%s685 + $0x8] sm:$0xff]
    %v688 = vld [vmem:[%s685 + $0x10] sm:$0xff]
    %v689 = vld [vmem:[%s685 + $0x18] sm:$0xff]
    %v690 = vld [vmem:[%s685 + $0x20] sm:$0xff]
    %v691 = vld [vmem:[%s685 + $0x28] sm:$0xff]
    %v692 = vld [vmem:[%s685 + $0x30] sm:$0xff]
    %v693 = vperm.slane %v692, 0
    %v695 = vsel %vm63, %v60, 0
    %v698 = vsel %vm63, %v61, 0
    %700 = vmatpush.msra.mxu0 0.0
    %701 = vmatpush.msra.mxu0 0.0
    %702 = vmatpush.msra.mxu0 0.0
    %703 = vmatpush.msra.mxu0 0.0
    %704 = vmatpush.msra.mxu0 0.0
    %705 = vmatpush.msra.mxu0 0.0
    %706 = vmatpush.msra.mxu0 0.0
    %707 = vmatpush.msra.mxu0 0.0
    %708 = vmatpush.msra.mxu0 0.0
    %709 = vmatpush.msra.mxu0 0.0
    %710 = vmatpush.msra.mxu0 0.0
    %711 = vmatpush.msra.mxu0 0.0
    %712 = vmatpush.msra.mxu0 0.0
    %713 = vmatpush.msra.mxu0 0.0
    %714 = vmatpush.msra.mxu0 %v687
    %715 = vmatpush.msra.mxu0 %v686
    %716 = vmatmul.f32.gmra.mxu0 %v695
    %v717 = vpop.f32.mrf.mxu0
    %v718 = vadd.f32 %v693, %v717
    %719 = vmatmul.f32.gmra.mxu0 %v698
    %v720 = vpop.f32.mrf.mxu0
    %v721 = vadd.f32 %v693, %v720
    %722 = vdwg.mxu0
    %v723 = vperm.slane %v692, 1
    %v725 = vrot.slane %v684, 6
    %v726 = vsel %vm97, %v725, 0
    %728 = vmatpush.msra.mxu0 0.0
    %729 = vmatpush.msra.mxu0 0.0
    %730 = vmatpush.msra.mxu0 0.0
    %731 = vmatpush.msra.mxu0 0.0
    %732 = vmatpush.msra.mxu0 0.0
    %733 = vmatpush.msra.mxu0 0.0
    %734 = vmatpush.msra.mxu0 0.0
    %735 = vmatpush.msra.mxu0 0.0
    %736 = vmatpush.msra.mxu0 0.0
    %737 = vmatpush.msra.mxu0 0.0
    %738 = vmatpush.msra.mxu0 0.0
    %739 = vmatpush.msra.mxu0 0.0
    %740 = vmatpush.msra.mxu0 %v691
    %741 = vmatpush.msra.mxu0 %v690
    %742 = vmatpush.msra.mxu0 %v689
    %743 = vmatpush.msra.mxu0 %v688
    %744 = vmatmul.f32.gmra.mxu0 %v726
    %v745 = vpop.f32.mrf.mxu0
    %v746 = vadd.f32 %v723, %v745
    %747 = vdwg.mxu0
    %v749 = vrot.slane %v746, 6
    %v751 = vrot.slane %v746, 4
    %v753 = vrot.slane %v746, 2
    %vm755 = vcmask 1041408
    %v756 = vsel %vm755, %v746, %v749
    %vm757 = vcmask 1043456
    %v758 = vsel %vm757, %v756, %v751
    %vm759 = vcmask 1045504
    %v760 = vsel %vm759, %v758, %v753
    %v762 = vrot.slane %v684, 4
    %v764 = vrot.slane %v684, 2
    %v766 = vsel %vm755, %v725, %v762
    %v767 = vsel %vm757, %v766, %v764
    %v768 = vsel %vm759, %v767, %v684
    %v769 = vadd.f32 %v718, %v760
    %v770 = vadd.f32 %v721, %v760
    %v771 = vxor.u32 %v769, 2147483648
    %v772 = vxor.u32 %v770, 2147483648
    %v773 = vmul.f32 %v771, 1.442695
    %v774 = vpow.pop %v773
    %v775 = vmul.f32 %v772, 1.442695
    %v776 = vpow.pop %v775
    %v777 = vadd.f32 %v774, 1.0
    %v778 = vadd.f32 %v776, 1.0
    %v779 = vrcp.pop %v777
    %v780 = vmul.f32 %v777, %v779
    %v781 = vsub.f32 1.0, %v780
    %v782 = vmul.f32 %v779, %v781
    %v783 = vadd.f32 %v779, %v782
    %vm784 = vweird.f32 %v777
    %vm785 = vweird.f32 %v779
    %vm786 = vmor %vm784, %vm785
    %v787 = vsel %vm786, %v779, %v783
    %v788 = vand.u32 2147483647, %v777
    %vm789 = vcmp.eq.f32.partialorder %v788, 8.507059e+37
    %v790 = vand.u32 %v777, 2147483648
    %v791 = vor.u32 1.1754944e-38, %v790
    %v792 = vsel %vm789, %v791, %v787
    %v793 = vmul.f32 1.0, %v792
    %v794 = vrcp.pop %v778
    %v795 = vmul.f32 %v778, %v794
    %v796 = vsub.f32 1.0, %v795
    %v797 = vmul.f32 %v794, %v796
    %v798 = vadd.f32 %v794, %v797
    %vm799 = vweird.f32 %v778
    %vm800 = vweird.f32 %v794
    %vm801 = vmor %vm799, %vm800
    %v802 = vsel %vm801, %v794, %v798
    %v803 = vand.u32 2147483647, %v778
    %vm804 = vcmp.eq.f32.partialorder %v803, 8.507059e+37
    %v805 = vand.u32 %v778, 2147483648
    %v806 = vor.u32 1.1754944e-38, %v805
    %v807 = vsel %vm804, %v806, %v802
    %v808 = vmul.f32 1.0, %v807
    %810 = vrot.lane.b32.xlu0 %v760, 64
    %v811 = vpop.permute.xlu0 %810
    %v813 = vmul.f32 %v793, %v811
    %v814 = vmul.f32 %v808, %v811
    %817 = vrot.lane.b32.xlu0 %v813, 64
    %v818 = vpop.permute.xlu0 %817
    %819 = vrot.lane.b32.xlu0 %v814, 64
    %v820 = vpop.permute.xlu0 %819
    %v823 = vadd.f32 %v718, %v818
    %v824 = vadd.f32 %v721, %v820
    %v825 = vtanh.pop %v823
    %v826 = vtanh.pop %v824
    %v827 = vsub.f32 1.0, %v793
    %v828 = vsub.f32 1.0, %v808
    %831 = vrot.lane.b32.xlu0 %v825, 96
    %v832 = vpop.permute.xlu0 %831
    %833 = vrot.lane.b32.xlu0 %v826, 96
    %v834 = vpop.permute.xlu0 %833
    %v837 = vmul.f32 %v827, %v832
    %v838 = vmul.f32 %v828, %v834
    %840 = vrot.lane.b32.xlu0 %v768, 32
    %v841 = vpop.permute.xlu0 %840
    %v843 = vmul.f32 %v793, %v841
    %v844 = vmul.f32 %v808, %v841
    %v845 = vadd.f32 %v837, %v843
    %v846 = vadd.f32 %v838, %v844
    %v847 = vld [vmem:[%s3] sm:$0xff]
    %v848 = vld [vmem:[%s3 + $0x8] sm:$0xff]
    %v849 = vld [vmem:[%s3 + $0x10] sm:$0xff]
    %v850 = vld [vmem:[%s3 + $0x18] sm:$0xff]
    %v851 = vld [vmem:[%s3 + $0x20] sm:$0x1]
    %v852 = vperm.slane %v851, 0
    %855 = vrot.lane.b32.xlu0 %v845, 96
    %v856 = vpop.permute.xlu0 %855
    %857 = vrot.lane.b32.xlu0 %v846, 96
    %v858 = vpop.permute.xlu0 %857
    %v859 = vsel %vm97, %v856, 0
    %v861 = vsel %vm97, %v858, 0
    %863 = vmatpush.msra.mxu0 0.0
    %864 = vmatpush.msra.mxu0 0.0
    %865 = vmatpush.msra.mxu0 0.0
    %866 = vmatpush.msra.mxu0 0.0
    %867 = vmatpush.msra.mxu0 0.0
    %868 = vmatpush.msra.mxu0 0.0
    %869 = vmatpush.msra.mxu0 0.0
    %870 = vmatpush.msra.mxu0 0.0
    %871 = vmatpush.msra.mxu0 0.0
    %872 = vmatpush.msra.mxu0 0.0
    %873 = vmatpush.msra.mxu0 0.0
    %874 = vmatpush.msra.mxu0 0.0
    %875 = vmatpush.msra.mxu0 %v850
    %876 = vmatpush.msra.mxu0 %v849
    %877 = vmatpush.msra.mxu0 %v848
    %878 = vmatpush.msra.mxu0 %v847
    %879 = vmatmul.f32.gmra.mxu0 %v859
    %v880 = vpop.f32.mrf.mxu0
    %v881 = vadd.f32 %v852, %v880
    %882 = vmatmul.f32.gmra.mxu0 %v861
    %v883 = vpop.f32.mrf.mxu0
    %v884 = vadd.f32 %v852, %v883
    %885 = vdwg.mxu0
    %886 = vst [vmem:[#allocation7] sm:$0xff] %v881
    %887 = vst [vmem:[#allocation7 + $0x8] sm:$0xff] %v884
    // Predicated region
    $region26: #{tpu_custom_call.1} parent=1 // pred_check
      _
    $region27: #{tpu_custom_call.1} parent=1 // pred_check_branch
      %889 = sbr.rel (0) target = $region29
    $region28: #{tpu_custom_call.1} parent=1 // pred_region
      %891 = vsyncadd [#allocation4], 0
      %s892 = sshll.u32 [#allocation7], 4
      %s893 = int_to_ptr.vmem [resolvable:$true] %s892
      %s894 = sshll.u32 %s4, 4
      %s895 = int_to_ptr.hbm [resolvable:$true] %s894
      %900 = dma.vmem_to_hbm [thread:$0]  %s893, 256, %s895, [#allocation4], 128, 128, 8
    $region29: #{tpu_custom_call.1} parent=1 // pred_fallthru
      _
    // Predicated region
    $region30: #{tpu_custom_call.1} parent=1 // pred_check
      _
    $region31: #{tpu_custom_call.1} parent=1 // pred_check_branch
      %902 = sbr.rel (0) target = $region33
    $region32: #{tpu_custom_call.1} parent=1 // pred_region
      %904 = dma.done [#allocation4], 256
    $region33: #{tpu_custom_call.1} parent=1 // pred_fallthru
      _
    %905 = vsyncpa [#allocation3], 1
    %906 = vsyncpa [#allocation6], 1
    %907 = vsyncpa [#allocation4], 1

</llo_original>
